<compile_context>
chip_gen: v7x
topology: tpu7x:2x2x1
jax: 0.10.0
libtpu: 0.0.40
codegen_flags: <defaults>
</compile_context>

<pallas_src>
import jax
import jax.numpy as jnp
from jax.experimental import pallas as pl
from jax.experimental.pallas import tpu as pltpu


def _equivariance_loss_kernel(det_ref, trans_ref, out_ref):
    # det_ref:   (B, K, 3) full array in VMEM (native dtype, no wrapper copy)
    # trans_ref: (B, K, 2) full array in VMEM (native dtype)
    # out_ref:   (1,) scalar in SMEM
    det_xy = det_ref[...][:, :, :2]          # static last-dim slice, in-kernel
    trans = trans_ref[...]

    # Elementwise sub/abs in the native compute dtype (bf16-friendly on
    # v6e/v7x); accumulate the reduction in f32.
    diff = jnp.abs(det_xy - trans)
    total = jnp.sum(diff.astype(jnp.float32))

    n = det_xy.shape[0] * det_xy.shape[1] * det_xy.shape[2]   # static count
    out_ref[0] = total / jnp.float32(n)      # true divide -> exact L1Loss mean


def equivariance_loss(detected_keypoints, transformed_keypoints):
    """L1 (mean) loss between detected_keypoints[:, :, :2] and transformed_keypoints."""
    n_elems = transformed_keypoints.size
    bytes_in = (detected_keypoints.size * detected_keypoints.dtype.itemsize
                + transformed_keypoints.size * transformed_keypoints.dtype.itemsize)
    cost = pl.CostEstimate(
        flops=3 * n_elems,          # sub, abs, add-reduce
        transcendentals=0,
        bytes_accessed=bytes_in + 4,
    )

    out = pl.pallas_call(
        _equivariance_loss_kernel,
        out_shape=jax.ShapeDtypeStruct((1,), jnp.float32),
        in_specs=[
            pl.BlockSpec(memory_space=pltpu.VMEM),
            pl.BlockSpec(memory_space=pltpu.VMEM),
        ],
        out_specs=pl.BlockSpec(memory_space=pltpu.SMEM),
        cost_estimate=cost,
    )(detected_keypoints, transformed_keypoints)
    return out[0]


if __name__ == "__main__":
    # Small, module-consistent shapes: batch=2, num_keypoints=16,
    # detected keypoints carry 3 coords (x, y, z), transformed carry 2 (x, y).
    key = jax.random.PRNGKey(0)
    k1, k2 = jax.random.split(key)
    detected = jax.random.normal(k1, (2, 16, 3), dtype=jnp.float32)
    transformed = jax.random.normal(k2, (2, 16, 2), dtype=jnp.float32)

    loss = equivariance_loss(detected, transformed)
    jax.block_until_ready(loss)

    # Sanity check against plain-JAX reference (nn.L1Loss(reduction='mean')).
    ref = jnp.mean(jnp.abs(detected[:, :, :2] - transformed))
    assert jnp.allclose(loss, ref, atol=1e-6, rtol=1e-6), (loss, ref)

    print("KERNEL_OK")
</pallas_src>

<mosaic_0001>
module attributes {stable_mosaic.version = 11 : i64} {
  func.func @_equivariance_loss_kernel(%arg0: memref<2x16x3xf32, #tpu.memory_space<vmem>>, %arg1: memref<2x16x2xf32, #tpu.memory_space<vmem>>, %arg2: memref<1xf32, #tpu.memory_space<smem>>) attributes {dimension_semantics = [], scalar_prefetch = 0 : i64, scratch_operands = 0 : i64, tpu.core_type = #tpu.core_type<tc>} {
    %c0 = arith.constant 0 : index
    %c0_0 = arith.constant 0 : index
    %c0_1 = arith.constant 0 : index
    %0 = vector.load %arg0[%c0, %c0_0, %c0_1] : memref<2x16x3xf32, #tpu.memory_space<vmem>>, vector<2x16x3xf32>
    %1 = vector.extract_strided_slice %0 {offsets = [0, 0, 0], sizes = [2, 16, 2], strides = [1, 1, 1]} : vector<2x16x3xf32> to vector<2x16x2xf32>
    %c0_2 = arith.constant 0 : index
    %c0_3 = arith.constant 0 : index
    %c0_4 = arith.constant 0 : index
    %2 = vector.load %arg1[%c0_2, %c0_3, %c0_4] : memref<2x16x2xf32, #tpu.memory_space<vmem>>, vector<2x16x2xf32>
    %3 = arith.subf %1, %2 : vector<2x16x2xf32>
    %4 = math.absf %3 : vector<2x16x2xf32>
    %5 = vector.shape_cast %4 : vector<2x16x2xf32> to vector<1x2x16x2xf32>
    %cst = arith.constant dense<0.000000e+00> : vector<1xf32>
    %6 = vector.multi_reduction <add>, %5, %cst [1, 2, 3] : vector<1x2x16x2xf32> to vector<1xf32>
    %7 = vector.shape_cast %6 : vector<1xf32> to vector<1x1x1x1xf32>
    %8 = vector.extract %7[0, 0, 0, 0] : f32 from vector<1x1x1x1xf32>
    %cst_5 = arith.constant 6.400000e+01 : f32
    %9 = arith.divf %8, %cst_5 : f32
    %c0_6 = arith.constant 0 : index
    %10 = memref.load %arg2[%c0_6] : memref<1xf32, #tpu.memory_space<smem>>
    memref.store %9, %arg2[%c0_6] : memref<1xf32, #tpu.memory_space<smem>>
    return
  }
}

</mosaic_0001>

<llo_original>
// kernel: tpu_custom_call.1
$region0: #{tpu_custom_call.1}
  #allocation0 [shape = 'u32[]', space=smem, size = 0x4, offset = 0x4, fixed_abs, tag = 'smem constant byte address 0x4 - core index']
  #allocation1 [shape = 'u32[144,128]{1,0:T(1,128)}', space=vmem, size = 0x12000, scoped, tag = 'internal scratch']
  %s0 = inlined_call_operand.vmem [shape: f32[2,16,3], index: 0, kind: input, shape index: {}]
  %s1 = inlined_call_operand.vmem [shape: f32[2,16,2], index: 1, kind: input, shape index: {}]
  %s2 = inlined_call_operand.hbm [shape: f32[1], index: 2, kind: output, shape index: {}]
  %s3 = sld [smem:[#allocation0]]
  $region18: #{tpu_custom_call.1} parent=0
    _
  %s5 = ssub.s32 1, %s3
  %s6 = scalar_select 0, %s5, %s3
  $region1: #{tpu_custom_call.1} parent=0
    #allocation2 [shape = 'u8[512]{0}', space=smem, size = 0x200, scoped, tag = 'output window, operand 0, single buffered']
    #allocation3 [shape = 's32[1]{0}', space=sflag, size = 0x4, scoped, tag = 'scoped memory for tpu_custom_call.1']
    %7 = vsyncpa [#allocation3], 0
    // Predicated region
    $region2: #{tpu_custom_call.1} parent=1 // pred_check
      _
    $region3: #{tpu_custom_call.1} parent=1 // pred_check_branch
      %9 = sbr.rel (0) target = $region5
    $region4: #{tpu_custom_call.1} parent=1 // pred_region
      _
    $region5: #{tpu_custom_call.1} parent=1 // pred_fallthru
      _
    // Predicated region
    $region6: #{tpu_custom_call.1} parent=1 // pred_check
      _
    $region7: #{tpu_custom_call.1} parent=1 // pred_check_branch
      %11 = sbr.rel (0) target = $region9
    $region8: #{tpu_custom_call.1} parent=1 // pred_region
      _
    $region9: #{tpu_custom_call.1} parent=1 // pred_fallthru
      _
    %v12 = vld [vmem:[%s0] sm:$0xff]
    %v13 = vld [vmem:[%s0 + $0x8] sm:$0xff]
    %v14 = vld [vmem:[%s0 + $0x10] sm:$0xff]
    %v15 = vld [vmem:[%s0 + $0x18] sm:$0xff]
    %v16 = vld [vmem:[%s1] sm:$0xff]
    %v17 = vld [vmem:[%s1 + $0x8] sm:$0xff]
    %v18 = vld [vmem:[%s1 + $0x10] sm:$0xff]
    %v19 = vld [vmem:[%s1 + $0x18] sm:$0xff]
    %v20 = vsub.f32 %v12, %v16
    %v21 = vsub.f32 %v13, %v17
    %v22 = vsub.f32 %v14, %v18
    %v23 = vsub.f32 %v15, %v19
    %v24 = vand.u32 2147483647, %v20
    %v25 = vand.u32 2147483647, %v21
    %v26 = vand.u32 2147483647, %v22
    %v27 = vand.u32 2147483647, %v23
    %vm28 = vcmask 15360
    %v29 = vsel %vm28, %v24, 0.0
    %v30 = vsel %vm28, %v25, 0.0
    %v31 = vadd.f32 %v29, %v30
    %v32 = vsel %vm28, %v26, 0.0
    %v33 = vadd.f32 %v31, %v32
    %v34 = vsel %vm28, %v27, 0.0
    %v35 = vadd.f32 %v33, %v34
    %36 = vadd.xlane.f32.xlu0 %v35
    %v37 = vpop.xlane.xlu0 %36
    %v38 = vrot.slane %v37, 4
    %v39 = vadd.f32 %v37, %v38
    %v40 = vrot.slane %v39, 2
    %v41 = vadd.f32 %v39, %v40
    %v42 = vrot.slane %v41, 1
    %v43 = vadd.f32 %v41, %v42
    %s44 = vtos %v43
    %v45 = vrcp.pop 64.0
    %s46 = vtos %v45
    %s47 = smul.f32 %s44, %s46
    %s48 = scalar_lea.smem [#allocation2], 0
    %49 = sst [smem:[%s48]] %s47
    // Predicated region
    $region10: #{tpu_custom_call.1} parent=1 // pred_check
      _
    $region11: #{tpu_custom_call.1} parent=1 // pred_check_branch
      %51 = sbr.rel (0) target = $region13
    $region12: #{tpu_custom_call.1} parent=1 // pred_region
      %s53 = ssub.s32 16, 16
      %54 = vsyncadd [#allocation3], %s53
      %57 = dma.smem_to_hbm [#allocation2], 16, %s2, [#allocation3]
    $region13: #{tpu_custom_call.1} parent=1 // pred_fallthru
      _
    // Predicated region
    $region14: #{tpu_custom_call.1} parent=1 // pred_check
      _
    $region15: #{tpu_custom_call.1} parent=1 // pred_check_branch
      %59 = sbr.rel (0) target = $region17
    $region16: #{tpu_custom_call.1} parent=1 // pred_region
      %60 = dma.done [#allocation3], 16
    $region17: #{tpu_custom_call.1} parent=1 // pred_fallthru
      _
    %61 = sfence
    %62 = vsyncpa [#allocation3], 1

</llo_original>
